<compile_context>
chip_gen: v5e
topology: v5e:2x2
jax: 0.10.0
libtpu: 0.0.40
codegen_flags: <defaults>
</compile_context>

<pallas_src>
import jax
import jax.numpy as jnp
import numpy as np
from jax import lax
from jax.experimental import pallas as pl
from jax.experimental.pallas import tpu as pltpu


# --------------------------------------------------------------------------- #
# Kernels
# --------------------------------------------------------------------------- #
def _pt_kernel_batch_lanes(w0_ref, w1_ref, bflat_ref, x0_ref, x1_ref, z_ref):
    """batch_first=False: features/ranks on sublanes, batch on lanes.

    KR = (W0 @ X0) * (W1 @ X1)   -- (r1*r2, TB), fused Khatri-Rao (no reshape)
    Z  = B_flat @ KR             -- (d0, TB), single MXU contraction over r1*r2
    """
    kr = (jnp.dot(w0_ref[...], x0_ref[...], preferred_element_type=jnp.float32)
          * jnp.dot(w1_ref[...], x1_ref[...], preferred_element_type=jnp.float32))
    z_ref[...] = jnp.dot(bflat_ref[...], kr,
                         preferred_element_type=jnp.float32).astype(z_ref.dtype)


def _pt_kernel_batch_rows(w0_ref, w1_ref, bflat_ref, x0_ref, x1_ref, z_ref):
    """batch_first=True: batch on sublanes; emits (TB, d0) directly (no transpose)."""
    dn = (((1,), (1,)), ((), ()))  # contract last dim of lhs with last dim of rhs
    kr = (lax.dot_general(x0_ref[...], w0_ref[...], dn,
                          preferred_element_type=jnp.float32)
          * lax.dot_general(x1_ref[...], w1_ref[...], dn,
                            preferred_element_type=jnp.float32))      # (TB, r1*r2)
    z_ref[...] = lax.dot_general(kr, bflat_ref[...], dn,
                                 preferred_element_type=jnp.float32
                                 ).astype(z_ref.dtype)                # (TB, d0)


# --------------------------------------------------------------------------- #
# One-time parameter preparation ("module init" work — not on the per-call path)
# --------------------------------------------------------------------------- #
def prepare_partial_tucker_params(B_core, U_matrices):
    """Repack parameters once so the forward pass needs no per-call XLA ops.

    Returns:
      B_flat: (d0, r1*r2)   mode-0 unfolding of the merged core (bitcast reshape)
      W0:     (r1*r2, d1)   row i1*r2+i2 = U0[:, i1]   (repeat rows of U0^T)
      W1:     (r1*r2, d2)   row i1*r2+i2 = U1[:, i2]   (tile rows of U1^T)
    so that khatri_rao(U0^T X0, U1^T X1) == (W0 @ X0) * (W1 @ X1).
    """
    U0, U1 = U_matrices
    d0, r1, r2 = B_core.shape
    B_flat = jnp.reshape(B_core, (d0, r1 * r2))
    W0 = jnp.repeat(jnp.transpose(U0), r2, axis=0)
    W1 = jnp.tile(jnp.transpose(U1), (r1, 1))
    return B_flat, W0, W1


# --------------------------------------------------------------------------- #
# Forward
# --------------------------------------------------------------------------- #
def partial_tucker_forward(X_matrices, prepared, *, batch_first=False,
                           batch_tile=512):
    """Pallas forward for the 3-mode PartialTucker using prepared params."""
    assert len(X_matrices) == 2, \
        "kernel specialized to 3-mode (two input matrices) PartialTucker"
    B_flat, W0, W1 = prepared
    d0, rr = B_flat.shape
    d1 = W0.shape[1]
    d2 = W1.shape[1]
    X0, X1 = X_matrices

    # Resident (weight) specs: same block on every grid step.
    w0_spec = pl.BlockSpec((rr, d1), lambda i: (0, 0))
    w1_spec = pl.BlockSpec((rr, d2), lambda i: (0, 0))
    b_spec = pl.BlockSpec((d0, rr), lambda i: (0, 0))

    if not batch_first:
        batch = X0.shape[1]
        bb = batch if batch <= batch_tile else batch_tile
        grid = (pl.cdiv(batch, bb),)
        return pl.pallas_call(
            _pt_kernel_batch_lanes,
            out_shape=jax.ShapeDtypeStruct((d0, batch), X0.dtype),
            grid=grid,
            in_specs=[
                w0_spec, w1_spec, b_spec,
                pl.BlockSpec((d1, bb), lambda i: (0, i)),
                pl.BlockSpec((d2, bb), lambda i: (0, i)),
            ],
            out_specs=pl.BlockSpec((d0, bb), lambda i: (0, i)),
            compiler_params=pltpu.CompilerParams(
                dimension_semantics=("parallel",)),
        )(W0, W1, B_flat, X0, X1)
    else:
        batch = X0.shape[0]
        bb = batch if batch <= batch_tile else batch_tile
        grid = (pl.cdiv(batch, bb),)
        return pl.pallas_call(
            _pt_kernel_batch_rows,
            out_shape=jax.ShapeDtypeStruct((batch, d0), X0.dtype),
            grid=grid,
            in_specs=[
                w0_spec, w1_spec, b_spec,
                pl.BlockSpec((bb, d1), lambda i: (i, 0)),
                pl.BlockSpec((bb, d2), lambda i: (i, 0)),
            ],
            out_specs=pl.BlockSpec((bb, d0), lambda i: (i, 0)),
            compiler_params=pltpu.CompilerParams(
                dimension_semantics=("parallel",)),
        )(W0, W1, B_flat, X0, X1)


# --------------------------------------------------------------------------- #
# Reference + test harness
# --------------------------------------------------------------------------- #
def _xavier_init(key, shape):
    """Deterministic xavier/glorot-uniform style init (matches shapes, not bits)."""
    fan_out = shape[0]
    fan_in = int(np.prod(shape[1:])) if len(shape) > 1 else shape[0]
    limit = float(np.sqrt(6.0 / (fan_in + fan_out)))
    return jax.random.uniform(key, shape, jnp.float32, minval=-limit, maxval=limit)


def _reference_partial_tucker(X_matrices, B_core, U_matrices, batch_first=False):
    """Pure-JAX replica of the PyTorch/tensorly forward (ground truth)."""
    if batch_first:
        X_matrices = [x.T for x in X_matrices]
    UX = [U_matrices[i].T @ X_matrices[i] for i in range(len(X_matrices))]
    # tensorly khatri_rao: first matrix varies slowest in the row index.
    kr = (UX[0][:, None, :] * UX[1][None, :, :]).reshape(-1, UX[0].shape[1])
    B1 = B_core.reshape(B_core.shape[0], -1)   # tensorly unfold(B, mode=0), C order
    Z = B1 @ kr
    return Z.T if batch_first else Z


if __name__ == "__main__":
    # Module config: full_tensor_dims = [32, 16, 12], rank = [_, 6, 5]
    d0, d1, d2 = 32, 16, 12
    r1, r2 = 6, 5

    key = jax.random.PRNGKey(0)
    k_b, k_u0, k_u1, k_x0, k_x1, k_x0b, k_x1b = jax.random.split(key, 7)

    B_core = _xavier_init(k_b, (d0, r1, r2))     # merged core B: (d0, r1, r2)
    U0 = _xavier_init(k_u0, (d1, r1))            # U_matrices[0]: (d1, r1)
    U1 = _xavier_init(k_u1, (d2, r2))            # U_matrices[1]: (d2, r2)

    # One-time ("init") parameter repack; per-call path has no extra XLA ops.
    prepared = prepare_partial_tucker_params(B_core, [U0, U1])
    prepared = jax.block_until_ready(prepared)

    # --- test 1: tiny batch (full-extent blocks), batch_first=False ----------
    batch = 8
    X0 = jax.random.normal(k_x0, (d1, batch), jnp.float32)
    X1 = jax.random.normal(k_x1, (d2, batch), jnp.float32)
    z = partial_tucker_forward([X0, X1], prepared, batch_first=False)
    jax.block_until_ready(z)
    z_ref = _reference_partial_tucker([X0, X1], B_core, [U0, U1], batch_first=False)
    np.testing.assert_allclose(np.asarray(z), np.asarray(z_ref),
                               rtol=1e-5, atol=1e-5)

    # --- test 2: lane-dense batch gridded over 2 blocks of 128 ---------------
    batch2 = 256
    X0b = jax.random.normal(k_x0b, (d1, batch2), jnp.float32)
    X1b = jax.random.normal(k_x1b, (d2, batch2), jnp.float32)
    z2 = partial_tucker_forward([X0b, X1b], prepared, batch_first=False,
                                batch_tile=128)
    jax.block_until_ready(z2)
    z2_ref = _reference_partial_tucker([X0b, X1b], B_core, [U0, U1],
                                       batch_first=False)
    np.testing.assert_allclose(np.asarray(z2), np.asarray(z2_ref),
                               rtol=1e-5, atol=1e-5)

    # --- test 3: batch_first=True emits (batch, d0) directly (no transpose) --
    z3 = partial_tucker_forward([X0.T, X1.T], prepared, batch_first=True)
    jax.block_until_ready(z3)
    z3_ref = _reference_partial_tucker([X0.T, X1.T], B_core, [U0, U1],
                                       batch_first=True)
    np.testing.assert_allclose(np.asarray(z3), np.asarray(z3_ref),
                               rtol=1e-5, atol=1e-5)

    print("KERNEL_OK")
</pallas_src>

<mosaic_0001>
module attributes {stable_mosaic.version = 11 : i64} {
  func.func @_pt_kernel_batch_lanes(%arg0: i32, %arg1: memref<30x16xf32, #tpu.memory_space<vmem>>, %arg2: memref<30x12xf32, #tpu.memory_space<vmem>>, %arg3: memref<32x30xf32, #tpu.memory_space<vmem>>, %arg4: memref<16x8xf32, #tpu.memory_space<vmem>>, %arg5: memref<12x8xf32, #tpu.memory_space<vmem>>, %arg6: memref<32x8xf32, #tpu.memory_space<vmem>>) attributes {dimension_semantics = [#tpu.dimension_semantics<parallel>], iteration_bounds = array<i64: 1>, scalar_prefetch = 0 : i64, scratch_operands = 0 : i64, tpu.core_type = #tpu.core_type<tc>, window_params = [{pipeline_mode = #tpu.pipeline_mode<synchronous>, transform_indices = @transform_0, window_bounds = array<i64: 30, 16>}, {pipeline_mode = #tpu.pipeline_mode<synchronous>, transform_indices = @transform_1, window_bounds = array<i64: 30, 12>}, {pipeline_mode = #tpu.pipeline_mode<synchronous>, transform_indices = @transform_2, window_bounds = array<i64: 32, 30>}, {transform_indices = @transform_3, window_bounds = array<i64: 16, 8>}, {transform_indices = @transform_4, window_bounds = array<i64: 12, 8>}, {transform_indices = @transform_5, window_bounds = array<i64: 32, 8>}]} {
    %c0 = arith.constant 0 : index
    %c0_0 = arith.constant 0 : index
    %0 = vector.load %arg1[%c0, %c0_0] : memref<30x16xf32, #tpu.memory_space<vmem>>, vector<30x16xf32>
    %c0_1 = arith.constant 0 : index
    %c0_2 = arith.constant 0 : index
    %1 = vector.load %arg4[%c0_1, %c0_2] : memref<16x8xf32, #tpu.memory_space<vmem>>, vector<16x8xf32>
    %cst = arith.constant dense<0.000000e+00> : vector<30x8xf32>
    %2 = tpu.matmul %0, %1, %cst {dimension_numbers = #tpu.dot_dimension_numbers<[1], [0], [0], [1], [0, 0, 1, 1], [], []>} : vector<30x16xf32>, vector<16x8xf32>, vector<30x8xf32> -> vector<30x8xf32>
    %c0_3 = arith.constant 0 : index
    %c0_4 = arith.constant 0 : index
    %3 = vector.load %arg2[%c0_3, %c0_4] : memref<30x12xf32, #tpu.memory_space<vmem>>, vector<30x12xf32>
    %c0_5 = arith.constant 0 : index
    %c0_6 = arith.constant 0 : index
    %4 = vector.load %arg5[%c0_5, %c0_6] : memref<12x8xf32, #tpu.memory_space<vmem>>, vector<12x8xf32>
    %cst_7 = arith.constant dense<0.000000e+00> : vector<30x8xf32>
    %5 = tpu.matmul %3, %4, %cst_7 {dimension_numbers = #tpu.dot_dimension_numbers<[1], [0], [0], [1], [0, 0, 1, 1], [], []>} : vector<30x12xf32>, vector<12x8xf32>, vector<30x8xf32> -> vector<30x8xf32>
    %6 = arith.mulf %2, %5 : vector<30x8xf32>
    %c0_8 = arith.constant 0 : index
    %c0_9 = arith.constant 0 : index
    %7 = vector.load %arg3[%c0_8, %c0_9] : memref<32x30xf32, #tpu.memory_space<vmem>>, vector<32x30xf32>
    %cst_10 = arith.constant dense<0.000000e+00> : vector<32x8xf32>
    %8 = tpu.matmul %7, %6, %cst_10 {dimension_numbers = #tpu.dot_dimension_numbers<[1], [0], [0], [1], [0, 0, 1, 1], [], []>} : vector<32x30xf32>, vector<30x8xf32>, vector<32x8xf32> -> vector<32x8xf32>
    %c0_11 = arith.constant 0 : index
    %c0_12 = arith.constant 0 : index
    %9 = vector.load %arg6[%c0_11, %c0_12] : memref<32x8xf32, #tpu.memory_space<vmem>>, vector<32x8xf32>
    tpu.vector_store %arg6[%c0_11, %c0_12], %8 {strides = array<i32>} : memref<32x8xf32, #tpu.memory_space<vmem>>, vector<32x8xf32>,
    return
  }
  func.func @transform_0(%arg0: i32) -> (i32, i32) {
    %c0_i32 = arith.constant 0 : i32
    %c0_i32_0 = arith.constant 0 : i32
    %c0_i32_1 = arith.constant 0 : i32
    return %c0_i32, %c0_i32_0 : i32, i32
  }
  func.func @transform_1(%arg0: i32) -> (i32, i32) {
    %c0_i32 = arith.constant 0 : i32
    %c0_i32_0 = arith.constant 0 : i32
    %c0_i32_1 = arith.constant 0 : i32
    return %c0_i32, %c0_i32_0 : i32, i32
  }
  func.func @transform_2(%arg0: i32) -> (i32, i32) {
    %c0_i32 = arith.constant 0 : i32
    %c0_i32_0 = arith.constant 0 : i32
    %c0_i32_1 = arith.constant 0 : i32
    return %c0_i32, %c0_i32_0 : i32, i32
  }
  func.func @transform_3(%arg0: i32) -> (i32, i32) {
    %c0_i32 = arith.constant 0 : i32
    %c0_i32_0 = arith.constant 0 : i32
    return %c0_i32, %arg0 : i32, i32
  }
  func.func @transform_4(%arg0: i32) -> (i32, i32) {
    %c0_i32 = arith.constant 0 : i32
    %c0_i32_0 = arith.constant 0 : i32
    return %c0_i32, %arg0 : i32, i32
  }
  func.func @transform_5(%arg0: i32) -> (i32, i32) {
    %c0_i32 = arith.constant 0 : i32
    %c0_i32_0 = arith.constant 0 : i32
    return %c0_i32, %arg0 : i32, i32
  }
}

</mosaic_0001>

<llo_original>
// kernel: tpu_custom_call.1
$region0: #{tpu_custom_call.1}
  #allocation0 [shape = 'u32[]', space=smem, size = 0x4, offset = 0x4, fixed_abs, tag = 'smem constant byte address 0x4 - core index']
  #allocation1 [shape = 'u32[72,128]{1,0:T(1,128)}', space=vmem, size = 0x9000, scoped, tag = 'internal scratch']
  %s0 = inlined_call_operand.vmem [shape: f32[30,16], index: 0, kind: input, shape index: {}]
  %s1 = inlined_call_operand.vmem [shape: f32[30,12], index: 1, kind: input, shape index: {}]
  %s2 = inlined_call_operand.vmem [shape: f32[32,30], index: 2, kind: input, shape index: {}]
  %s3 = inlined_call_operand.vmem [shape: f32[16,8], index: 3, kind: input, shape index: {}]
  %s4 = inlined_call_operand.vmem [shape: f32[12,8], index: 4, kind: input, shape index: {}]
  %s5 = inlined_call_operand.vmem [shape: f32[32,8], index: 5, kind: output, shape index: {}]
  %s6 = sld [smem:[#allocation0]]
  $region30: #{tpu_custom_call.1} parent=0
    _
  %s8 = ssub.s32 1, %s6
  %s9 = scalar_select 0, %s8, %s6
  // Predicated region
  $region2: #{tpu_custom_call.1} parent=0 // pred_check
    _
  $region3: #{tpu_custom_call.1} parent=0 // pred_check_branch
    %11 = sbr.rel (0) target = $region5
  $region4: #{tpu_custom_call.1} parent=0 // pred_region
    _
  $region5: #{tpu_custom_call.1} parent=0 // pred_fallthru
    _
  // Predicated region
  $region6: #{tpu_custom_call.1} parent=0 // pred_check
    _
  $region7: #{tpu_custom_call.1} parent=0 // pred_check_branch
    %13 = sbr.rel (0) target = $region9
  $region8: #{tpu_custom_call.1} parent=0 // pred_region
    _
  $region9: #{tpu_custom_call.1} parent=0 // pred_fallthru
    _
  // Predicated region
  $region10: #{tpu_custom_call.1} parent=0 // pred_check
    _
  $region11: #{tpu_custom_call.1} parent=0 // pred_check_branch
    %15 = sbr.rel (0) target = $region13
  $region12: #{tpu_custom_call.1} parent=0 // pred_region
    _
  $region13: #{tpu_custom_call.1} parent=0 // pred_fallthru
    _
  // Predicated region
  $region14: #{tpu_custom_call.1} parent=0 // pred_check
    _
  $region15: #{tpu_custom_call.1} parent=0 // pred_check_branch
    %17 = sbr.rel (0) target = $region17
  $region16: #{tpu_custom_call.1} parent=0 // pred_region
    _
  $region17: #{tpu_custom_call.1} parent=0 // pred_fallthru
    _
  // Predicated region
  $region18: #{tpu_custom_call.1} parent=0 // pred_check
    _
  $region19: #{tpu_custom_call.1} parent=0 // pred_check_branch
    %19 = sbr.rel (0) target = $region21
  $region20: #{tpu_custom_call.1} parent=0 // pred_region
    _
  $region21: #{tpu_custom_call.1} parent=0 // pred_fallthru
    _
  %v20 = vld [vmem:[%s0] sm:$0xff]
  %v21 = vld [vmem:[%s0 + $0x8] sm:$0xff]
  %v22 = vld [vmem:[%s0 + $0x10] sm:$0xff]
  %v23 = vld [vmem:[%s0 + $0x18] sm:$0x3f]
  %v24 = vld [vmem:[%s3] sm:$0xff]
  %v25 = vld [vmem:[%s3 + $0x8] sm:$0xff]
  %vm26 = vcmask 130048
  %v28 = vsel %vm26, %v20, 0
  %v31 = vsel %vm26, %v21, 0
  %v34 = vsel %vm26, %v22, 0
  %v37 = vsel %vm26, %v23, 0
  %39 = vmatpush.msra.mxu0 0.0
  %40 = vmatpush.msra.mxu0 0.0
  %41 = vmatpush.msra.mxu0 0.0
  %42 = vmatpush.msra.mxu0 0.0
  %43 = vmatpush.msra.mxu0 0.0
  %44 = vmatpush.msra.mxu0 0.0
  %45 = vmatpush.msra.mxu0 0.0
  %46 = vmatpush.msra.mxu0 0.0
  %47 = vmatpush.msra.mxu0 0.0
  %48 = vmatpush.msra.mxu0 0.0
  %49 = vmatpush.msra.mxu0 0.0
  %50 = vmatpush.msra.mxu0 0.0
  %51 = vmatpush.msra.mxu0 0.0
  %52 = vmatpush.msra.mxu0 0.0
  %53 = vmatpush.msra.mxu0 %v25
  %54 = vmatpush.msra.mxu0 %v24
  %55 = vmatmul.f32.gmra.mxu0 %v28
  %v56 = vpop.f32.mrf.mxu0
  %v57 = vadd.f32 0.0, %v56
  %58 = vmatmul.f32.gmra.mxu0 %v31
  %v59 = vpop.f32.mrf.mxu0
  %v60 = vadd.f32 0.0, %v59
  %61 = vmatmul.f32.gmra.mxu0 %v34
  %v62 = vpop.f32.mrf.mxu0
  %v63 = vadd.f32 0.0, %v62
  %64 = vmatmul.f32.gmra.mxu0 %v37
  %v65 = vpop.f32.mrf.mxu0
  %v66 = vadd.f32 0.0, %v65
  %67 = vdwg.mxu0
  %v68 = vld [vmem:[%s1] sm:$0xff]
  %v69 = vld [vmem:[%s1 + $0x8] sm:$0xff]
  %v70 = vld [vmem:[%s1 + $0x10] sm:$0xff]
  %v71 = vld [vmem:[%s1 + $0x18] sm:$0x3f]
  %v72 = vld [vmem:[%s4] sm:$0xff]
  %v73 = vld [vmem:[%s4 + $0x8] sm:$0xf]
  %vm74 = vcmask 97280
  %v76 = vsel %vm74, %v68, 0
  %v79 = vsel %vm74, %v69, 0
  %v82 = vsel %vm74, %v70, 0
  %v85 = vsel %vm74, %v71, 0
  %vm87 = vcmask 1043456
  %v89 = vsel %vm87, %v73, 0
  %91 = vmatpush.msra.mxu0 0.0
  %92 = vmatpush.msra.mxu0 0.0
  %93 = vmatpush.msra.mxu0 0.0
  %94 = vmatpush.msra.mxu0 0.0
  %95 = vmatpush.msra.mxu0 0.0
  %96 = vmatpush.msra.mxu0 0.0
  %97 = vmatpush.msra.mxu0 0.0
  %98 = vmatpush.msra.mxu0 0.0
  %99 = vmatpush.msra.mxu0 0.0
  %100 = vmatpush.msra.mxu0 0.0
  %101 = vmatpush.msra.mxu0 0.0
  %102 = vmatpush.msra.mxu0 0.0
  %103 = vmatpush.msra.mxu0 0.0
  %104 = vmatpush.msra.mxu0 0.0
  %105 = vmatpush.msra.mxu0 %v89
  %106 = vmatpush.msra.mxu0 %v72
  %107 = vmatmul.f32.gmra.mxu0 %v76
  %v108 = vpop.f32.mrf.mxu0
  %v109 = vadd.f32 0.0, %v108
  %110 = vmatmul.f32.gmra.mxu0 %v79
  %v111 = vpop.f32.mrf.mxu0
  %v112 = vadd.f32 0.0, %v111
  %113 = vmatmul.f32.gmra.mxu0 %v82
  %v114 = vpop.f32.mrf.mxu0
  %v115 = vadd.f32 0.0, %v114
  %116 = vmatmul.f32.gmra.mxu0 %v85
  %v117 = vpop.f32.mrf.mxu0
  %v118 = vadd.f32 0.0, %v117
  %119 = vdwg.mxu0
  %v120 = vmul.f32 %v57, %v109
  %v121 = vmul.f32 %v60, %v112
  %v122 = vmul.f32 %v63, %v115
  %v123 = vmul.f32 %v66, %v118
  %v124 = vld [vmem:[%s2] sm:$0xff]
  %v125 = vld [vmem:[%s2 + $0x8] sm:$0xff]
  %v126 = vld [vmem:[%s2 + $0x10] sm:$0xff]
  %v127 = vld [vmem:[%s2 + $0x18] sm:$0xff]
  %vm128 = vcmask 244736
  %v130 = vsel %vm128, %v124, 0
  %v133 = vsel %vm128, %v125, 0
  %v136 = vsel %vm128, %v126, 0
  %v139 = vsel %vm128, %v127, 0
  %vm141 = vcmask 1045504
  %v143 = vsel %vm141, %v123, 0
  %145 = vmatpush.msra.mxu0 0.0
  %146 = vmatpush.msra.mxu0 0.0
  %147 = vmatpush.msra.mxu0 0.0
  %148 = vmatpush.msra.mxu0 0.0
  %149 = vmatpush.msra.mxu0 0.0
  %150 = vmatpush.msra.mxu0 0.0
  %151 = vmatpush.msra.mxu0 0.0
  %152 = vmatpush.msra.mxu0 0.0
  %153 = vmatpush.msra.mxu0 0.0
  %154 = vmatpush.msra.mxu0 0.0
  %155 = vmatpush.msra.mxu0 0.0
  %156 = vmatpush.msra.mxu0 0.0
  %157 = vmatpush.msra.mxu0 %v143
  %158 = vmatpush.msra.mxu0 %v122
  %159 = vmatpush.msra.mxu0 %v121
  %160 = vmatpush.msra.mxu0 %v120
  %161 = vmatmul.f32.gmra.mxu0 %v130
  %v162 = vpop.f32.mrf.mxu0
  %v163 = vadd.f32 0.0, %v162
  %164 = vmatmul.f32.gmra.mxu0 %v133
  %v165 = vpop.f32.mrf.mxu0
  %v166 = vadd.f32 0.0, %v165
  %167 = vmatmul.f32.gmra.mxu0 %v136
  %v168 = vpop.f32.mrf.mxu0
  %v169 = vadd.f32 0.0, %v168
  %170 = vmatmul.f32.gmra.mxu0 %v139
  %v171 = vpop.f32.mrf.mxu0
  %v172 = vadd.f32 0.0, %v171
  %173 = vdwg.mxu0
  %vm174 = vcmask 64512
  %175 = vst.msk [vmem:[%s5] sm:$0xff] %vm174, %v163
  %176 = vst.msk [vmem:[%s5 + $0x8] sm:$0xff] %vm174, %v166
  %177 = vst.msk [vmem:[%s5 + $0x10] sm:$0xff] %vm174, %v169
  %178 = vst.msk [vmem:[%s5 + $0x18] sm:$0xff] %vm174, %v172
  // Predicated region
  $region22: #{tpu_custom_call.1} parent=0 // pred_check
    _
  $region23: #{tpu_custom_call.1} parent=0 // pred_check_branch
    %180 = sbr.rel (0) target = $region25
  $region24: #{tpu_custom_call.1} parent=0 // pred_region
    _
  $region25: #{tpu_custom_call.1} parent=0 // pred_fallthru
    _
  // Predicated region
  $region26: #{tpu_custom_call.1} parent=0 // pred_check
    _
  $region27: #{tpu_custom_call.1} parent=0 // pred_check_branch
    %182 = sbr.rel (0) target = $region29
  $region28: #{tpu_custom_call.1} parent=0 // pred_region
    _
  $region29: #{tpu_custom_call.1} parent=0 // pred_fallthru
    _

</llo_original>
